<compile_context>
chip_gen: v7x
topology: tpu7x:2x2x1
jax: 0.10.0
libtpu: 0.0.40
codegen_flags: <defaults>
</compile_context>

<pallas_src>
import functools

import jax
import jax.numpy as jnp
from jax import lax
from jax.experimental import pallas as pl
from jax.experimental.pallas import tpu as pltpu


def _dwconv_kernel(x_ref, w_ref, b_ref, o_ref, *,
                   kh_sz, kw_sz, stride, dilation, h_out_blk, w_out, w_span):
    """One (batch, H-tile, channel-tile) grid step.

    x_ref: (1, H_window, Wp, Cblk)      padded input window      [VMEM]
    w_ref: (KH*KW, Cblk)                per-channel tap weights  [VMEM]
    b_ref: (1, Cblk)                    per-channel bias         [VMEM]
    o_ref: (1, h_out_blk, w_out, Cblk)  output slab              [VMEM]
    """
    c_blk = o_ref.shape[-1]
    w_taps = w_ref[...].astype(jnp.float32)   # (KH*KW, Cblk), loaded once
    bias = b_ref[...].astype(jnp.float32)     # (1, Cblk)

    def row_body(h, carry):
        acc = jnp.zeros((w_out, c_blk), jnp.float32)
        for i in range(kh_sz):
            in_row = h * stride + i * dilation
            for j in range(kw_sz):
                # Per-tap window read straight from the ref: channels stay on
                # lanes, the kw shift is a sublane offset, the kh shift is a
                # row-address offset.
                win = x_ref[0, in_row, pl.ds(j * dilation, w_span), :]
                win = win.astype(jnp.float32)
                if stride > 1:
                    win = win[::stride]       # W stride lands on sublanes, not lanes
                acc = acc + win * w_taps[i * kw_sz + j][None, :]
        o_ref[0, h] = (acc + bias).astype(o_ref.dtype)
        return carry

    # TODO(synk): tune fori_loop unroll once blocks are large enough to be
    # compute-visible; default is fine at these sizes.
    lax.fori_loop(0, h_out_blk, row_body, 0)


def depthwise_conv2d(x, weight, bias=None, *, stride=1, padding=0, dilation=1):
    """Depthwise conv matching nn.Conv2d(C, C, k, stride, padding, dilation,
    groups=C, padding_mode='zeros').

    x: (B, C, H, W) NCHW; weight: (C, 1, KH, KW); bias: (C,) or None.
    """
    B, C, H, W = x.shape
    KH, KW = weight.shape[-2:]
    if bias is None:
        bias = jnp.zeros((C,), x.dtype)

    # --- glue: NCHW -> NHWC (channels on lanes) + zero padding ---------------
    x_nhwc = jnp.transpose(x, (0, 2, 3, 1))
    x_pad = jnp.pad(
        x_nhwc, ((0, 0), (padding, padding), (padding, padding), (0, 0)))
    Hp, Wp = H + 2 * padding, W + 2 * padding
    out_h = (Hp - dilation * (KH - 1) - 1) // stride + 1
    out_w = (Wp - dilation * (KW - 1) - 1) // stride + 1
    w_span = (out_w - 1) * stride + 1          # contiguous W window per tap

    # --- channel tiling: 128 lanes when divisible, else full C ---------------
    c_blk = 128 if C % 128 == 0 else C
    n_c = C // c_blk

    # --- H tiling: cap input block at ~2 MiB, keep it a divisor of out_h -----
    row_bytes = Wp * c_blk * x.dtype.itemsize
    in_rows_cap = max(1, (2 * 1024 * 1024) // max(1, row_bytes))
    h_cap = max(1, (in_rows_cap - dilation * (KH - 1) - 1) // stride + 1)
    h_out_blk = min(out_h, h_cap)
    while out_h % h_out_blk:
        h_out_blk -= 1
    n_h = out_h // h_out_blk
    h_in_blk = (h_out_blk - 1) * stride + dilation * (KH - 1) + 1
    h_step = h_out_blk * stride                # element offset between H windows

    # --- parameters as lane vectors in VMEM: (KH*KW, C) and (1, C) -----------
    w_taps = weight.reshape(C, KH * KW).T.astype(jnp.float32)
    bias2d = bias.reshape(1, C).astype(jnp.float32)

    if n_h == 1:
        # Single H tile: plain blocked indexing over the full padded height.
        x_spec = pl.BlockSpec((1, Hp, Wp, c_blk),
                              lambda b, ht, ct: (b, 0, 0, ct))
    else:
        # Overlapping H windows (KH halo) via element offsets on the H dim.
        x_spec = pl.BlockSpec((1, pl.Element(h_in_blk), Wp, c_blk),
                              lambda b, ht, ct: (b, ht * h_step, 0, ct))

    kernel = functools.partial(
        _dwconv_kernel,
        kh_sz=KH, kw_sz=KW, stride=stride, dilation=dilation,
        h_out_blk=h_out_blk, w_out=out_w, w_span=w_span,
    )

    out_nhwc = pl.pallas_call(
        kernel,
        grid=(B, n_h, n_c),
        in_specs=[
            x_spec,
            pl.BlockSpec((KH * KW, c_blk), lambda b, ht, ct: (0, ct)),
            pl.BlockSpec((1, c_blk), lambda b, ht, ct: (0, ct)),
        ],
        out_specs=pl.BlockSpec((1, h_out_blk, out_w, c_blk),
                               lambda b, ht, ct: (b, ht, 0, ct)),
        out_shape=jax.ShapeDtypeStruct((B, out_h, out_w, C), x.dtype),
        compiler_params=pltpu.CompilerParams(
            dimension_semantics=("parallel", "parallel", "parallel"),
            vmem_limit_bytes=32 * 1024 * 1024),
    )(x_pad, w_taps, bias2d)

    # --- glue: NHWC -> NCHW back to the PyTorch layout ------------------------
    return jnp.transpose(out_nhwc, (0, 3, 1, 2))


if __name__ == "__main__":
    # DepthWiseConv(channels=4, kernel_size=3, stride=1, padding=1, bias=True)
    B, C, H, W = 2, 4, 16, 16
    KH = KW = 3
    stride, padding, dilation = 1, 1, 1

    key = jax.random.PRNGKey(0)
    kx, kwt, kb = jax.random.split(key, 3)
    x = jax.random.normal(kx, (B, C, H, W), dtype=jnp.float32)
    # nn.Conv2d depthwise weight shape: (C, 1, KH, KW).
    weight = jax.random.normal(kwt, (C, 1, KH, KW), dtype=jnp.float32) * 0.1
    bias = jax.random.normal(kb, (C,), dtype=jnp.float32) * 0.1

    out = depthwise_conv2d(x, weight, bias,
                           stride=stride, padding=padding, dilation=dilation)
    out = jax.block_until_ready(out)

    # Reference: grouped conv via lax (groups == channels -> depthwise).
    ref = lax.conv_general_dilated(
        x, weight,
        window_strides=(stride, stride),
        padding=((padding, padding), (padding, padding)),
        rhs_dilation=(dilation, dilation),
        dimension_numbers=("NCHW", "OIHW", "NCHW"),
        feature_group_count=C,
    ) + bias[None, :, None, None]

    assert out.shape == ref.shape, (out.shape, ref.shape)
    assert jnp.allclose(out, ref, atol=1e-5, rtol=1e-5), \
        float(jnp.max(jnp.abs(out - ref)))
    print("KERNEL_OK")
</pallas_src>

<mosaic_0001>
module attributes {stable_mosaic.version = 11 : i64} {
  func.func @_dwconv_kernel(%arg0: i32, %arg1: i32, %arg2: i32, %arg3: memref<1x18x18x4xf32, #tpu.memory_space<vmem>>, %arg4: memref<9x4xf32, #tpu.memory_space<vmem>>, %arg5: memref<1x4xf32, #tpu.memory_space<vmem>>, %arg6: memref<1x16x16x4xf32, #tpu.memory_space<vmem>>) attributes {dimension_semantics = [#tpu.dimension_semantics<parallel>, #tpu.dimension_semantics<parallel>, #tpu.dimension_semantics<parallel>], iteration_bounds = array<i64: 2, 1, 1>, scalar_prefetch = 0 : i64, scratch_operands = 0 : i64, tpu.core_type = #tpu.core_type<tc>, window_params = [{transform_indices = @transform_0, window_bounds = array<i64: 1, 18, 18, 4>}, {transform_indices = @transform_1, window_bounds = array<i64: 9, 4>}, {transform_indices = @transform_2, window_bounds = array<i64: 1, 4>}, {transform_indices = @transform_3, window_bounds = array<i64: 1, 16, 16, 4>}]} {
    %c0 = arith.constant 0 : index
    %c0_0 = arith.constant 0 : index
    %0 = vector.load %arg4[%c0, %c0_0] : memref<9x4xf32, #tpu.memory_space<vmem>>, vector<9x4xf32>
    %c0_1 = arith.constant 0 : index
    %c0_2 = arith.constant 0 : index
    %1 = vector.load %arg5[%c0_1, %c0_2] : memref<1x4xf32, #tpu.memory_space<vmem>>, vector<1x4xf32>
    %c0_i32 = arith.constant 0 : i32
    %c16_i32 = arith.constant 16 : i32
    %2 = arith.addi %c0_i32, %c16_i32 : i32
    %c1_i32 = arith.constant 1 : i32
    scf.for %arg7 = %c0_i32 to %2 step %c1_i32  : i32 {
      %cst = arith.constant 0.000000e+00 : f32
      %3 = vector.broadcast %cst : f32 to vector<16x4xf32>
      %c1_i32_4 = arith.constant 1 : i32
      %4 = arith.muli %arg7, %c1_i32_4 : i32
      %c0_i32_5 = arith.constant 0 : i32
      %5 = arith.addi %4, %c0_i32_5 : i32
      %c0_6 = arith.constant 0 : index
      %6 = arith.index_cast %5 : i32 to index
      %c0_7 = arith.constant 0 : index
      %c0_8 = arith.constant 0 : index
      %7 = vector.load %arg3[%c0_6, %6, %c0_7, %c0_8] : memref<1x18x18x4xf32, #tpu.memory_space<vmem>>, vector<1x1x16x4xf32>
      %8 = vector.shape_cast %7 : vector<1x1x16x4xf32> to vector<16x4xf32>
      %9 = vector.extract_strided_slice %0 {offsets = [0, 0], sizes = [1, 4], strides = [1, 1]} : vector<9x4xf32> to vector<1x4xf32>
      %10 = vector.shape_cast %9 : vector<1x4xf32> to vector<4xf32>
      %11 = vector.shape_cast %10 : vector<4xf32> to vector<1x4xf32>
      %12 = vector.broadcast %11 : vector<1x4xf32> to vector<16x4xf32>
      %13 = arith.mulf %8, %12 : vector<16x4xf32>
      %14 = arith.addf %3, %13 : vector<16x4xf32>
      %c0_9 = arith.constant 0 : index
      %15 = arith.index_cast %5 : i32 to index
      %c1 = arith.constant 1 : index
      %c0_10 = arith.constant 0 : index
      %16 = vector.load %arg3[%c0_9, %15, %c1, %c0_10] : memref<1x18x18x4xf32, #tpu.memory_space<vmem>>, vector<1x1x16x4xf32>
      %17 = vector.shape_cast %16 : vector<1x1x16x4xf32> to vector<16x4xf32>
      %18 = vector.extract_strided_slice %0 {offsets = [1, 0], sizes = [1, 4], strides = [1, 1]} : vector<9x4xf32> to vector<1x4xf32>
      %19 = vector.shape_cast %18 : vector<1x4xf32> to vector<4xf32>
      %20 = vector.shape_cast %19 : vector<4xf32> to vector<1x4xf32>
      %21 = vector.broadcast %20 : vector<1x4xf32> to vector<16x4xf32>
      %22 = arith.mulf %17, %21 : vector<16x4xf32>
      %23 = arith.addf %14, %22 : vector<16x4xf32>
      %c0_11 = arith.constant 0 : index
      %24 = arith.index_cast %5 : i32 to index
      %c2 = arith.constant 2 : index
      %c0_12 = arith.constant 0 : index
      %25 = vector.load %arg3[%c0_11, %24, %c2, %c0_12] : memref<1x18x18x4xf32, #tpu.memory_space<vmem>>, vector<1x1x16x4xf32>
      %26 = vector.shape_cast %25 : vector<1x1x16x4xf32> to vector<16x4xf32>
      %27 = vector.extract_strided_slice %0 {offsets = [2, 0], sizes = [1, 4], strides = [1, 1]} : vector<9x4xf32> to vector<1x4xf32>
      %28 = vector.shape_cast %27 : vector<1x4xf32> to vector<4xf32>
      %29 = vector.shape_cast %28 : vector<4xf32> to vector<1x4xf32>
      %30 = vector.broadcast %29 : vector<1x4xf32> to vector<16x4xf32>
      %31 = arith.mulf %26, %30 : vector<16x4xf32>
      %32 = arith.addf %23, %31 : vector<16x4xf32>
      %c1_i32_13 = arith.constant 1 : i32
      %33 = arith.muli %arg7, %c1_i32_13 : i32
      %c1_i32_14 = arith.constant 1 : i32
      %34 = arith.addi %33, %c1_i32_14 : i32
      %c0_15 = arith.constant 0 : index
      %35 = arith.index_cast %34 : i32 to index
      %c0_16 = arith.constant 0 : index
      %c0_17 = arith.constant 0 : index
      %36 = vector.load %arg3[%c0_15, %35, %c0_16, %c0_17] : memref<1x18x18x4xf32, #tpu.memory_space<vmem>>, vector<1x1x16x4xf32>
      %37 = vector.shape_cast %36 : vector<1x1x16x4xf32> to vector<16x4xf32>
      %38 = vector.extract_strided_slice %0 {offsets = [3, 0], sizes = [1, 4], strides = [1, 1]} : vector<9x4xf32> to vector<1x4xf32>
      %39 = vector.shape_cast %38 : vector<1x4xf32> to vector<4xf32>
      %40 = vector.shape_cast %39 : vector<4xf32> to vector<1x4xf32>
      %41 = vector.broadcast %40 : vector<1x4xf32> to vector<16x4xf32>
      %42 = arith.mulf %37, %41 : vector<16x4xf32>
      %43 = arith.addf %32, %42 : vector<16x4xf32>
      %c0_18 = arith.constant 0 : index
      %44 = arith.index_cast %34 : i32 to index
      %c1_19 = arith.constant 1 : index
      %c0_20 = arith.constant 0 : index
      %45 = vector.load %arg3[%c0_18, %44, %c1_19, %c0_20] : memref<1x18x18x4xf32, #tpu.memory_space<vmem>>, vector<1x1x16x4xf32>
      %46 = vector.shape_cast %45 : vector<1x1x16x4xf32> to vector<16x4xf32>
      %47 = vector.extract_strided_slice %0 {offsets = [4, 0], sizes = [1, 4], strides = [1, 1]} : vector<9x4xf32> to vector<1x4xf32>
      %48 = vector.shape_cast %47 : vector<1x4xf32> to vector<4xf32>
      %49 = vector.shape_cast %48 : vector<4xf32> to vector<1x4xf32>
      %50 = vector.broadcast %49 : vector<1x4xf32> to vector<16x4xf32>
      %51 = arith.mulf %46, %50 : vector<16x4xf32>
      %52 = arith.addf %43, %51 : vector<16x4xf32>
      %c0_21 = arith.constant 0 : index
      %53 = arith.index_cast %34 : i32 to index
      %c2_22 = arith.constant 2 : index
      %c0_23 = arith.constant 0 : index
      %54 = vector.load %arg3[%c0_21, %53, %c2_22, %c0_23] : memref<1x18x18x4xf32, #tpu.memory_space<vmem>>, vector<1x1x16x4xf32>
      %55 = vector.shape_cast %54 : vector<1x1x16x4xf32> to vector<16x4xf32>
      %56 = vector.extract_strided_slice %0 {offsets = [5, 0], sizes = [1, 4], strides = [1, 1]} : vector<9x4xf32> to vector<1x4xf32>
      %57 = vector.shape_cast %56 : vector<1x4xf32> to vector<4xf32>
      %58 = vector.shape_cast %57 : vector<4xf32> to vector<1x4xf32>
      %59 = vector.broadcast %58 : vector<1x4xf32> to vector<16x4xf32>
      %60 = arith.mulf %55, %59 : vector<16x4xf32>
      %61 = arith.addf %52, %60 : vector<16x4xf32>
      %c1_i32_24 = arith.constant 1 : i32
      %62 = arith.muli %arg7, %c1_i32_24 : i32
      %c2_i32 = arith.constant 2 : i32
      %63 = arith.addi %62, %c2_i32 : i32
      %c0_25 = arith.constant 0 : index
      %64 = arith.index_cast %63 : i32 to index
      %c0_26 = arith.constant 0 : index
      %c0_27 = arith.constant 0 : index
      %65 = vector.load %arg3[%c0_25, %64, %c0_26, %c0_27] : memref<1x18x18x4xf32, #tpu.memory_space<vmem>>, vector<1x1x16x4xf32>
      %66 = vector.shape_cast %65 : vector<1x1x16x4xf32> to vector<16x4xf32>
      %67 = vector.extract_strided_slice %0 {offsets = [6, 0], sizes = [1, 4], strides = [1, 1]} : vector<9x4xf32> to vector<1x4xf32>
      %68 = vector.shape_cast %67 : vector<1x4xf32> to vector<4xf32>
      %69 = vector.shape_cast %68 : vector<4xf32> to vector<1x4xf32>
      %70 = vector.broadcast %69 : vector<1x4xf32> to vector<16x4xf32>
      %71 = arith.mulf %66, %70 : vector<16x4xf32>
      %72 = arith.addf %61, %71 : vector<16x4xf32>
      %c0_28 = arith.constant 0 : index
      %73 = arith.index_cast %63 : i32 to index
      %c1_29 = arith.constant 1 : index
      %c0_30 = arith.constant 0 : index
      %74 = vector.load %arg3[%c0_28, %73, %c1_29, %c0_30] : memref<1x18x18x4xf32, #tpu.memory_space<vmem>>, vector<1x1x16x4xf32>
      %75 = vector.shape_cast %74 : vector<1x1x16x4xf32> to vector<16x4xf32>
      %76 = vector.extract_strided_slice %0 {offsets = [7, 0], sizes = [1, 4], strides = [1, 1]} : vector<9x4xf32> to vector<1x4xf32>
      %77 = vector.shape_cast %76 : vector<1x4xf32> to vector<4xf32>
      %78 = vector.shape_cast %77 : vector<4xf32> to vector<1x4xf32>
      %79 = vector.broadcast %78 : vector<1x4xf32> to vector<16x4xf32>
      %80 = arith.mulf %75, %79 : vector<16x4xf32>
      %81 = arith.addf %72, %80 : vector<16x4xf32>
      %c0_31 = arith.constant 0 : index
      %82 = arith.index_cast %63 : i32 to index
      %c2_32 = arith.constant 2 : index
      %c0_33 = arith.constant 0 : index
      %83 = vector.load %arg3[%c0_31, %82, %c2_32, %c0_33] : memref<1x18x18x4xf32, #tpu.memory_space<vmem>>, vector<1x1x16x4xf32>
      %84 = vector.shape_cast %83 : vector<1x1x16x4xf32> to vector<16x4xf32>
      %85 = vector.extract_strided_slice %0 {offsets = [8, 0], sizes = [1, 4], strides = [1, 1]} : vector<9x4xf32> to vector<1x4xf32>
      %86 = vector.shape_cast %85 : vector<1x4xf32> to vector<4xf32>
      %87 = vector.shape_cast %86 : vector<4xf32> to vector<1x4xf32>
      %88 = vector.broadcast %87 : vector<1x4xf32> to vector<16x4xf32>
      %89 = arith.mulf %84, %88 : vector<16x4xf32>
      %90 = arith.addf %81, %89 : vector<16x4xf32>
      %91 = vector.broadcast %1 : vector<1x4xf32> to vector<16x4xf32>
      %92 = arith.addf %90, %91 : vector<16x4xf32>
      %c0_34 = arith.constant 0 : index
      %93 = arith.index_cast %arg7 : i32 to index
      %c0_35 = arith.constant 0 : index
      %c0_36 = arith.constant 0 : index
      %94 = vector.load %arg6[%c0_34, %93, %c0_35, %c0_36] : memref<1x16x16x4xf32, #tpu.memory_space<vmem>>, vector<1x1x16x4xf32>
      %95 = vector.shape_cast %94 : vector<1x1x16x4xf32> to vector<16x4xf32>
      %96 = vector.shape_cast %92 : vector<16x4xf32> to vector<1x1x16x4xf32>
      tpu.vector_store %arg6[%c0_34, %93, %c0_35, %c0_36], %96 {strides = array<i32>} : memref<1x16x16x4xf32, #tpu.memory_space<vmem>>, vector<1x1x16x4xf32>,
    }
    %c16_i32_3 = arith.constant 16 : i32
    return
  }
  func.func @transform_0(%arg0: i32, %arg1: i32, %arg2: i32) -> (i32, i32, i32, i32) {
    %c0_i32 = arith.constant 0 : i32
    %c0_i32_0 = arith.constant 0 : i32
    %c0_i32_1 = arith.constant 0 : i32
    return %arg0, %c0_i32, %c0_i32_0, %arg2 : i32, i32, i32, i32
  }
  func.func @transform_1(%arg0: i32, %arg1: i32, %arg2: i32) -> (i32, i32) {
    %c0_i32 = arith.constant 0 : i32
    %c0_i32_0 = arith.constant 0 : i32
    return %c0_i32, %arg2 : i32, i32
  }
  func.func @transform_2(%arg0: i32, %arg1: i32, %arg2: i32) -> (i32, i32) {
    %c0_i32 = arith.constant 0 : i32
    %c0_i32_0 = arith.constant 0 : i32
    return %c0_i32, %arg2 : i32, i32
  }
  func.func @transform_3(%arg0: i32, %arg1: i32, %arg2: i32) -> (i32, i32, i32, i32) {
    %c0_i32 = arith.constant 0 : i32
    %c0_i32_0 = arith.constant 0 : i32
    return %arg0, %arg1, %c0_i32, %arg2 : i32, i32, i32, i32
  }
}

</mosaic_0001>

<llo_original>
// kernel: tpu_custom_call.1
$region0: #{tpu_custom_call.1}
  #allocation0 [shape = 'u32[]', space=smem, size = 0x4, offset = 0x4, fixed_abs, tag = 'smem constant byte address 0x4 - core index']
  #allocation1 [shape = 'u32[144,128]{1,0:T(1,128)}', space=vmem, size = 0x12000, scoped, tag = 'internal scratch']
  %s0 = inlined_call_operand.vmem [shape: f32[2,18,18,4], index: 0, kind: input, shape index: {}]
  %s1 = inlined_call_operand.vmem [shape: f32[9,4], index: 1, kind: input, shape index: {}]
  %s2 = inlined_call_operand.vmem [shape: f32[1,4], index: 2, kind: input, shape index: {}]
  %s3 = inlined_call_operand.vmem [shape: f32[2,16,16,4], index: 3, kind: output, shape index: {}]
  %s4 = sld [smem:[#allocation0]]
  $region52: #{tpu_custom_call.1} parent=0
    _
  %s6 = ssub.s32 1, %s4
  %s7 = scalar_select 0, %s6, %s4
  loop: start=0, step=1, limit=4
  $region2: #{tpu_custom_call.1} parent=0 // loop_pre_header
    _
  $region3: #{tpu_custom_call.1} parent=0 // loop_header
    %s9 = sphi 0, %s13
    %p10 = scmp.ge.s32.totalorder %s9, 4
    %s16 = sphi 0, %s35
    %s17 = sphi 0, %s31
    %s18 = sphi 0, %s27
    %s19 = sphi 0, %s16
    %s20 = sphi 0, %s17
    %s21 = sphi 0, %s18
    %s22 = sphi 0, %s19
    %s23 = sphi 0, %s20
    %s24 = sphi 0, %s21
    %s40 = sphi 0, %s42
    %s43 = sphi 0, %s40
    %s44 = sphi 0, %s43
    %s60 = sphi 0, %s44
    %s66 = sphi 0, %s68
    %s69 = sphi 0, %s66
    %s70 = sphi 0, %s69
    %s86 = sphi 0, %s70
    %s92 = sphi 0, %s94
    %s95 = sphi 0, %s92
    %s96 = sphi 0, %s95
    %s112 = sphi 0, %s96
    %s122 = sphi 0, %s124
    %s125 = sphi 0, %s122
    %s126 = sphi 0, %s125
    %s142 = sphi 0, %s126
  $region4: #{tpu_custom_call.1} parent=0 // loop_header_branch
    %12 = sbr.rel (%p10) target = $region8
  $region5: #{tpu_custom_call.1} parent=0 // loop_body
    %s14 = ssub.s32 %s9, 1
    %s15 = ssub.s32 %s9, 2
    %s25 = sadd.s32 1, %s18
    %p26 = scmp.ge.s32.totalorder %s25, 1
    %s27 = scalar_select %p26, 0, %s25
    %s28 = sadd.s32 1, %s17
    %s29 = scalar_select %p26, %s28, %s17
    %p30 = scmp.ge.s32.totalorder %s29, 1
    %s31 = scalar_select %p30, 0, %s29
    %s32 = sadd.s32 1, %s16
    %s33 = scalar_select %p30, %s32, %s16
    %p34 = scmp.ge.s32.totalorder %s33, 2
    %s35 = scalar_select %p34, 0, %s33
    %s36 = ssub.s32 %s16, %s35
    %s37 = ssub.s32 %s18, %s27
    %s38 = sor.u32 %s36, %s37
    %p39 = scmp.eq.s32.totalorder %s38, 0
    %s41 = sadd.s32 %s40, 1
    %s42 = scalar_select %p39, %s40, %s41
    %p45 = pneg %p39
    %p46 = scmp.eq.s32.totalorder %s9, 1
    %p47 = por %p45, %p46
    %p48 = scmp.ne.s32.totalorder %s40, %s43
    %p49 = scmp.eq.s32.totalorder %s9, 0
    %p50 = por %p48, %p49
    %p51 = scmp.ne.s32.totalorder %s40, %s43
    %p52 = scmp.eq.s32.totalorder %s14, 1
    %p53 = por %p51, %p52
    %p54 = scmp.ne.s32.totalorder %s43, %s44
    %p55 = scmp.eq.s32.totalorder %s14, 0
    %p56 = por %p54, %p55
    %p57 = scmp.ne.s32.totalorder %s43, %s44
    %p58 = scmp.eq.s32.totalorder %s15, 1
    %p59 = por %p57, %p58
    %p61 = scmp.ne.s32.totalorder %s44, %s60
    %p62 = scmp.eq.s32.totalorder %s15, 0
    %p63 = por %p61, %p62
    %s64 = ssub.s32 %s18, %s27
    %p65 = scmp.eq.s32.totalorder %s64, 0
    %s67 = sadd.s32 %s66, 1
    %s68 = scalar_select %p65, %s66, %s67
    %p71 = pneg %p65
    %p72 = scmp.eq.s32.totalorder %s9, 1
    %p73 = por %p71, %p72
    %p74 = scmp.ne.s32.totalorder %s66, %s69
    %p75 = scmp.eq.s32.totalorder %s9, 0
    %p76 = por %p74, %p75
    %p77 = scmp.ne.s32.totalorder %s66, %s69
    %p78 = scmp.eq.s32.totalorder %s14, 1
    %p79 = por %p77, %p78
    %p80 = scmp.ne.s32.totalorder %s69, %s70
    %p81 = scmp.eq.s32.totalorder %s14, 0
    %p82 = por %p80, %p81
    %p83 = scmp.ne.s32.totalorder %s69, %s70
    %p84 = scmp.eq.s32.totalorder %s15, 1
    %p85 = por %p83, %p84
    %p87 = scmp.ne.s32.totalorder %s70, %s86
    %p88 = scmp.eq.s32.totalorder %s15, 0
    %p89 = por %p87, %p88
    %s90 = ssub.s32 %s18, %s27
    %p91 = scmp.eq.s32.totalorder %s90, 0
    %s93 = sadd.s32 %s92, 1
    %s94 = scalar_select %p91, %s92, %s93
    %p97 = pneg %p91
    %p98 = scmp.eq.s32.totalorder %s9, 1
    %p99 = por %p97, %p98
    %p100 = scmp.ne.s32.totalorder %s92, %s95
    %p101 = scmp.eq.s32.totalorder %s9, 0
    %p102 = por %p100, %p101
    %p103 = scmp.ne.s32.totalorder %s92, %s95
    %p104 = scmp.eq.s32.totalorder %s14, 1
    %p105 = por %p103, %p104
    %p106 = scmp.ne.s32.totalorder %s95, %s96
    %p107 = scmp.eq.s32.totalorder %s14, 0
    %p108 = por %p106, %p107
    %p109 = scmp.ne.s32.totalorder %s95, %s96
    %p110 = scmp.eq.s32.totalorder %s15, 1
    %p111 = por %p109, %p110
    %p113 = scmp.ne.s32.totalorder %s96, %s112
    %p114 = scmp.eq.s32.totalorder %s15, 0
    %p115 = por %p113, %p114
    %s116 = ssub.s32 %s16, %s35
    %s117 = ssub.s32 %s17, %s31
    %s118 = sor.u32 %s116, %s117
    %s119 = ssub.s32 %s18, %s27
    %s120 = sor.u32 %s118, %s119
    %p121 = scmp.eq.s32.totalorder %s120, 0
    %s123 = sadd.s32 %s122, 1
    %s124 = scalar_select %p121, %s122, %s123
    %p127 = pneg %p121
    %p128 = scmp.eq.s32.totalorder %s9, 1
    %p129 = por %p127, %p128
    %p130 = scmp.ne.s32.totalorder %s122, %s125
    %p131 = scmp.eq.s32.totalorder %s9, 0
    %p132 = por %p130, %p131
    %p133 = scmp.ne.s32.totalorder %s122, %s125
    %p134 = scmp.eq.s32.totalorder %s14, 1
    %p135 = por %p133, %p134
    %p136 = scmp.ne.s32.totalorder %s125, %s126
    %p137 = scmp.eq.s32.totalorder %s14, 0
    %p138 = por %p136, %p137
    %p139 = scmp.ne.s32.totalorder %s125, %s126
    %p140 = scmp.eq.s32.totalorder %s15, 1
    %p141 = por %p139, %p140
    %p143 = scmp.ne.s32.totalorder %s126, %s142
    %p144 = scmp.eq.s32.totalorder %s15, 0
    %p145 = por %p143, %p144
    %p146 = scmp.le.s32.totalorder 1, %s9
    %p147 = scmp.lt.s32.totalorder %s9, 3
    %p148 = pnand %p146, %p147
    %p149 = pneg %p148
    // Predicated region
    $region9: #{tpu_custom_call.1} parent=5 // pred_check
      _
    $region10: #{tpu_custom_call.1} parent=5 // pred_check_branch
      %151 = sbr.rel (%p148) target = $region12
    $region11: #{tpu_custom_call.1} parent=5 // pred_region
      %s152 = ssub.s32 %s9, 1
      // Predicated region
      $region13: #{tpu_custom_call.1} parent=11 // pred_check
        %p153 = pneg %p82
      $region14: #{tpu_custom_call.1} parent=11 // pred_check_branch
        %155 = sbr.rel (%p153) target = $region16
      $region15: #{tpu_custom_call.1} parent=11 // pred_region
        %p156 = scmp.lt.s32.totalorder %s21, 0
        %s157 = scalar_select %p156, %s21, 0
        %s158 = smul.addr %s157, 8
        %s159 = scalar_lea.vmem %s1, %s158
      $region16: #{tpu_custom_call.1} parent=11 // pred_fallthru
        _
      // Predicated region
      $region17: #{tpu_custom_call.1} parent=11 // pred_check
        %p160 = pneg %p108
      $region18: #{tpu_custom_call.1} parent=11 // pred_check_branch
        %162 = sbr.rel (%p160) target = $region20
      $region19: #{tpu_custom_call.1} parent=11 // pred_region
        %p163 = scmp.lt.s32.totalorder %s21, 0
        %s164 = scalar_select %p163, %s21, 0
        %s165 = scalar_lea.vmem %s2, %s164
      $region20: #{tpu_custom_call.1} parent=11 // pred_fallthru
        _
    $region12: #{tpu_custom_call.1} parent=5 // pred_fallthru
      _
    %p166 = scmp.lt.s32.totalorder %s9, 2
    // Predicated region
    $region21: #{tpu_custom_call.1} parent=5 // pred_check
      %p167 = pneg %p166
    $region22: #{tpu_custom_call.1} parent=5 // pred_check_branch
      %169 = sbr.rel (%p167) target = $region24
    $region23: #{tpu_custom_call.1} parent=5 // pred_region
      // Predicated region
      $region25: #{tpu_custom_call.1} parent=23 // pred_check
        %p170 = pneg %p50
      $region26: #{tpu_custom_call.1} parent=23 // pred_check_branch
        %172 = sbr.rel (%p170) target = $region28
      $region27: #{tpu_custom_call.1} parent=23 // pred_region
        %p173 = scmp.lt.s32.totalorder %s16, 1
        %s174 = scalar_select %p173, %s16, 1
        %p175 = scmp.lt.s32.totalorder %s18, 0
        %s176 = scalar_select %p175, %s18, 0
        %s177 = smul.addr %s174, 54
        %s178 = sadd.s32 %s176, %s177
        %s179 = smul.addr %s178, 8
        %s180 = scalar_lea.vmem %s0, %s179
      $region28: #{tpu_custom_call.1} parent=23 // pred_fallthru
        _
    $region24: #{tpu_custom_call.1} parent=5 // pred_fallthru
      _
    %p181 = scmp.le.s32.totalorder 1, %s9
    %p182 = scmp.lt.s32.totalorder %s9, 3
    %p183 = pnand %p181, %p182
    %p184 = pneg %p183
    // Predicated region
    $region29: #{tpu_custom_call.1} parent=5 // pred_check
      _
    $region30: #{tpu_custom_call.1} parent=5 // pred_check_branch
      %186 = sbr.rel (%p183) target = $region32
    $region31: #{tpu_custom_call.1} parent=5 // pred_region
      %s187 = ssub.s32 %s9, 1
      %p188 = scmp.lt.s32.totalorder %s19, 1
      %s189 = scalar_select %p188, %s19, 1
      %p190 = scmp.lt.s32.totalorder %s21, 0
      %s191 = scalar_select %p190, %s21, 0
      %s192 = smul.addr %s189, 54
      %s193 = sadd.s32 %s191, %s192
      %s194 = smul.addr %s193, 8
      %s195 = scalar_lea.vmem %s0, %s194
      %p196 = pneg %p56
      %p197 = pneg %p53
      %p198 = scmp.lt.s32.totalorder %s21, 0
      %s199 = scalar_select %p198, %s21, 0
      %s200 = smul.addr %s199, 8
      %s201 = scalar_lea.vmem %s1, %s200
      %p202 = pneg %p82
      %p203 = pneg %p79
      %p204 = scmp.lt.s32.totalorder %s21, 0
      %s205 = scalar_select %p204, %s21, 0
      %s206 = scalar_lea.vmem %s2, %s205
      %p207 = pneg %p108
      %p208 = pneg %p105
      %p209 = pneg %p138
      %p210 = pneg %p135
      %s211 = smul.u32 16, %s20
      %p212 = scmp.lt.s32.totalorder %s19, 1
      %s213 = scalar_select %p212, %s19, 1
      %p214 = scmp.lt.s32.totalorder %s211, 15
      %s215 = scalar_select %p214, %s211, 15
      %p216 = scmp.lt.s32.totalorder %s21, 0
      %s217 = scalar_select %p216, %s21, 0
      %s218 = smul.addr %s215, 2
      %s219 = sadd.s32 %s217, %s218
      %s220 = smul.addr %s213, 32
      %s221 = sadd.s32 %s219, %s220
      %s222 = smul.addr %s221, 8
      %s223 = scalar_lea.vmem %s3, %s222
      %p224 = scmp.lt.s32.totalorder %s19, 1
      %s225 = scalar_select %p224, %s19, 1
      %p226 = scmp.lt.s32.totalorder %s21, 0
      %s227 = scalar_select %p226, %s21, 0
      %s228 = smul.addr %s225, 54
      %s229 = sadd.s32 %s227, %s228
      %s230 = smul.addr %s229, 8
      %s231 = scalar_lea.vmem %s0, %s230
      %p232 = scmp.lt.s32.totalorder %s21, 0
      %s233 = scalar_select %p232, %s21, 0
      %s234 = smul.addr %s233, 8
      %s235 = scalar_lea.vmem %s1, %s234
      %p236 = scmp.lt.s32.totalorder %s21, 0
      %s237 = scalar_select %p236, %s21, 0
      %s238 = scalar_lea.vmem %s2, %s237
      %s239 = smul.u32 16, %s20
      %p240 = scmp.lt.s32.totalorder %s19, 1
      %s241 = scalar_select %p240, %s19, 1
      %p242 = scmp.lt.s32.totalorder %s239, 15
      %s243 = scalar_select %p242, %s239, 15
      %p244 = scmp.lt.s32.totalorder %s21, 0
      %s245 = scalar_select %p244, %s21, 0
      %s246 = smul.addr %s243, 2
      %s247 = sadd.s32 %s245, %s246
      %s248 = smul.addr %s241, 32
      %s249 = sadd.s32 %s247, %s248
      %s250 = smul.addr %s249, 8
      %s251 = scalar_lea.vmem %s3, %s250
      %s252 = smul.u32 16, %s20
      %v253 = vld [vmem:[%s235] sm:$0xff]
      %v254 = vld [vmem:[%s235 + $0x8] sm:$0x1]
      %v255 = vld [vmem:[%s238] sm:$0x1]
      loop: start=0, step=1, limit=16
      $region33: #{tpu_custom_call.1} parent=31 // loop_pre_header
        _
      $region34: #{tpu_custom_call.1} parent=31 // loop_header
        %s257 = sphi 0, %s261
        %p258 = scmp.ge.s32.totalorder %s257, 16
      $region35: #{tpu_custom_call.1} parent=31 // loop_header_branch
        %260 = sbr.rel (%p258) target = $region39
      $region36: #{tpu_custom_call.1} parent=31 // loop_body
        %s262 = smul.u32 %s257, 24
        %s263 = scalar_lea.vmem %s231, %s262
        %v264 = vld [vmem:[%s263] sm:$0xff]
        %v265 = vld [vmem:[%s263 + $0x8] sm:$0xff]
        %v266 = vlaneseq
        %v267 = vshrl.u32 %v266, 7
        %v268 = vsub.s32 0, %v267
        %v269 = vrot.slane %v253, %v268
        %v270 = vmul.f32 %v264, %v269
        %v271 = vmul.f32 %v265, %v269
        %v272 = vadd.f32 %v270, 0.0
        %v273 = vadd.f32 %v271, 0.0
        %v274 = vld [vmem:[%s263 + $0x1] sm:$0xff]
        %v275 = vld [vmem:[%s263 + $0x9] sm:$0xff]
        %v276 = vlaneseq
        %v277 = vshrl.u32 %v276, 7
        %v278 = vsub.s32 1, %v277
        %v279 = vrot.slane %v253, %v278
        %v280 = vmul.f32 %v274, %v279
        %v281 = vmul.f32 %v275, %v279
        %v282 = vadd.f32 %v272, %v280
        %v283 = vadd.f32 %v273, %v281
        %v284 = vld [vmem:[%s263 + $0x2] sm:$0xff]
        %v285 = vld [vmem:[%s263 + $0xa] sm:$0xff]
        %v286 = vlaneseq
        %v287 = vshrl.u32 %v286, 7
        %v288 = vsub.s32 2, %v287
        %v289 = vrot.slane %v253, %v288
        %v290 = vmul.f32 %v284, %v289
        %v291 = vmul.f32 %v285, %v289
        %v292 = vadd.f32 %v282, %v290
        %v293 = vadd.f32 %v283, %v291
        %s294 = sadd.s32 %s257, 1
        %s295 = smul.u32 %s294, 24
        %s296 = scalar_lea.vmem %s231, %s295
        %v297 = vld [vmem:[%s296] sm:$0xff]
        %v298 = vld [vmem:[%s296 + $0x8] sm:$0xff]
        %v299 = vlaneseq
        %v300 = vshrl.u32 %v299, 7
        %v301 = vsub.s32 3, %v300
        %v302 = vrot.slane %v253, %v301
        %v303 = vmul.f32 %v297, %v302
        %v304 = vmul.f32 %v298, %v302
        %v305 = vadd.f32 %v292, %v303
        %v306 = vadd.f32 %v293, %v304
        %v307 = vld [vmem:[%s296 + $0x1] sm:$0xff]
        %v308 = vld [vmem:[%s296 + $0x9] sm:$0xff]
        %v309 = vlaneseq
        %v310 = vshrl.u32 %v309, 7
        %v311 = vsub.s32 4, %v310
        %v312 = vrot.slane %v253, %v311
        %v313 = vmul.f32 %v307, %v312
        %v314 = vmul.f32 %v308, %v312
        %v315 = vadd.f32 %v305, %v313
        %v316 = vadd.f32 %v306, %v314
        %v317 = vld [vmem:[%s296 + $0x2] sm:$0xff]
        %v318 = vld [vmem:[%s296 + $0xa] sm:$0xff]
        %v319 = vlaneseq
        %v320 = vshrl.u32 %v319, 7
        %v321 = vsub.s32 5, %v320
        %v322 = vrot.slane %v253, %v321
        %v323 = vmul.f32 %v317, %v322
        %v324 = vmul.f32 %v318, %v322
        %v325 = vadd.f32 %v315, %v323
        %v326 = vadd.f32 %v316, %v324
        %s327 = sadd.s32 %s257, 2
        %s328 = smul.u32 %s327, 24
        %s329 = scalar_lea.vmem %s231, %s328
        %v330 = vld [vmem:[%s329] sm:$0xff]
        %v331 = vld [vmem:[%s329 + $0x8] sm:$0xff]
        %v332 = vlaneseq
        %v333 = vshrl.u32 %v332, 7
        %v334 = vsub.s32 6, %v333
        %v335 = vrot.slane %v253, %v334
        %v336 = vmul.f32 %v330, %v335
        %v337 = vmul.f32 %v331, %v335
        %v338 = vadd.f32 %v325, %v336
        %v339 = vadd.f32 %v326, %v337
        %v340 = vld [vmem:[%s329 + $0x1] sm:$0xff]
        %v341 = vld [vmem:[%s329 + $0x9] sm:$0xff]
        %v342 = vlaneseq
        %v343 = vshrl.u32 %v342, 7
        %v344 = vsub.s32 7, %v343
        %v345 = vrot.slane %v253, %v344
        %v346 = vmul.f32 %v340, %v345
        %v347 = vmul.f32 %v341, %v345
        %v348 = vadd.f32 %v338, %v346
        %v349 = vadd.f32 %v339, %v347
        %v350 = vld [vmem:[%s329 + $0x2] sm:$0xff]
        %v351 = vld [vmem:[%s329 + $0xa] sm:$0xff]
        %v352 = vlaneseq
        %v353 = vshrl.u32 %v352, 7
        %v354 = vsub.s32 0, %v353
        %v355 = vrot.slane %v254, %v354
        %v356 = vmul.f32 %v350, %v355
        %v357 = vmul.f32 %v351, %v355
        %v358 = vadd.f32 %v348, %v356
        %v359 = vadd.f32 %v349, %v357
        %v361 = vlaneseq
        %v362 = vshrl.u32 %v361, 7
        %v363 = vsub.s32 0, %v362
        %v364 = vrot.slane %v255, %v363
        %v366 = vadd.f32 %v358, %v364
        %v367 = vadd.f32 %v359, %v364
        %s368 = smul.u32 %s257, 16
        %s369 = scalar_lea.vmem %s251, %s368
        %vm370 = vcmask 31744
        %371 = vst.msk [vmem:[%s369] sm:$0xff] %vm370, %v366
        %372 = vst.msk [vmem:[%s369 + $0x8] sm:$0xff] %vm370, %v367
      $region37: #{tpu_custom_call.1} parent=31 // loop_footer
        %s261 = sadd.s32 1, %s257
      $region38: #{tpu_custom_call.1} parent=31 // loop_footer_branch
        %256 = sbr.rel target = $region34
      $region39: #{tpu_custom_call.1} parent=31 // loop_exit
        _
      %s373 = smul.u32 16, %s20
      %p374 = scmp.lt.s32.totalorder %s19, 1
      %s375 = scalar_select %p374, %s19, 1
      %p376 = scmp.lt.s32.totalorder %s373, 15
      %s377 = scalar_select %p376, %s373, 15
      %p378 = scmp.lt.s32.totalorder %s21, 0
      %s379 = scalar_select %p378, %s21, 0
      %s380 = smul.addr %s377, 2
      %s381 = sadd.s32 %s379, %s380
      %s382 = smul.addr %s375, 32
      %s383 = sadd.s32 %s381, %s382
      %s384 = smul.addr %s383, 8
      %s385 = scalar_lea.vmem %s3, %s384
      // Predicated region
      $region40: #{tpu_custom_call.1} parent=31 // pred_check
        %p386 = pneg %p135
      $region41: #{tpu_custom_call.1} parent=31 // pred_check_branch
        %388 = sbr.rel (%p386) target = $region43
      $region42: #{tpu_custom_call.1} parent=31 // pred_region
        %s389 = smul.u32 16, %s20
      $region43: #{tpu_custom_call.1} parent=31 // pred_fallthru
        _
    $region32: #{tpu_custom_call.1} parent=5 // pred_fallthru
      _
    %p390 = scmp.le.s32.totalorder 2, %s9
    // Predicated region
    $region44: #{tpu_custom_call.1} parent=5 // pred_check
      %p391 = pneg %p390
    $region45: #{tpu_custom_call.1} parent=5 // pred_check_branch
      %393 = sbr.rel (%p391) target = $region47
    $region46: #{tpu_custom_call.1} parent=5 // pred_region
      %s394 = ssub.s32 %s9, 2
      // Predicated region
      $region48: #{tpu_custom_call.1} parent=46 // pred_check
        %p395 = pneg %p141
      $region49: #{tpu_custom_call.1} parent=46 // pred_check_branch
        %397 = sbr.rel (%p395) target = $region51
      $region50: #{tpu_custom_call.1} parent=46 // pred_region
        %s398 = smul.u32 16, %s23
        %p399 = scmp.lt.s32.totalorder %s22, 1
        %s400 = scalar_select %p399, %s22, 1
        %p401 = scmp.lt.s32.totalorder %s398, 15
        %s402 = scalar_select %p401, %s398, 15
        %p403 = scmp.lt.s32.totalorder %s24, 0
        %s404 = scalar_select %p403, %s24, 0
        %s405 = smul.addr %s402, 2
        %s406 = sadd.s32 %s404, %s405
        %s407 = smul.addr %s400, 32
        %s408 = sadd.s32 %s406, %s407
        %s409 = smul.addr %s408, 8
        %s410 = scalar_lea.vmem %s3, %s409
      $region51: #{tpu_custom_call.1} parent=46 // pred_fallthru
        _
    $region47: #{tpu_custom_call.1} parent=5 // pred_fallthru
      _
  $region6: #{tpu_custom_call.1} parent=0 // loop_footer
    %s13 = sadd.s32 1, %s9
  $region7: #{tpu_custom_call.1} parent=0 // loop_footer_branch
    %8 = sbr.rel target = $region3
  $region8: #{tpu_custom_call.1} parent=0 // loop_exit
    _

</llo_original>
